<compile_context>
chip_gen: v5e
topology: v5e:2x2
jax: 0.10.0
libtpu: 0.0.40
codegen_flags: <defaults>
</compile_context>

<pallas_src>
import functools

import jax
import jax.numpy as jnp
from jax.experimental import pallas as pl
from jax.experimental.pallas import tpu as pltpu


def _mapnet_kernel(x_ref, w1_ref, b1_ref, w2_ref, b2_ref, w3_ref, b3_ref, o_ref):
    # f32 operands on the MXU (compute is hidden behind the HBM stream),
    # f32 accumulation; elementwise bias/ReLU on the VPU in f32.
    x = x_ref[...].astype(jnp.float32)                                 # (TB, 25)

    # Linear(25 -> 64) + ReLU
    h1 = jnp.dot(x, w1_ref[...], preferred_element_type=jnp.float32) + b1_ref[...]
    h1 = jnp.maximum(h1, 0.0)

    # Linear(64 -> 128) + ReLU
    h2 = jnp.dot(h1, w2_ref[...], preferred_element_type=jnp.float32) + b2_ref[...]
    h2 = jnp.maximum(h2, 0.0)

    # Linear(128 -> 128)
    out = jnp.dot(h2, w3_ref[...], preferred_element_type=jnp.float32) + b3_ref[...]
    o_ref[...] = out.astype(o_ref.dtype)


def _cdiv(a, b):
    return -(-a // b)


def _round_up(n, m):
    return ((n + m - 1) // m) * m


@functools.partial(jax.jit,
                   static_argnames=("block_b", "out_dtype", "use_pallas"))
def mapnet_forward(maps, params, *, block_b=2048, out_dtype=jnp.float32,
                   use_pallas=None):
    """maps: (B, 5, 5) (anything flattening to 25 features per row)."""
    B = maps.shape[0]
    x = maps.reshape(B, -1)                          # Flatten(1) -> (B, 25); free
    if x.dtype not in (jnp.float32, jnp.bfloat16):
        x = x.astype(jnp.float32)
    F = x.shape[1]

    w1, b1, w2, b2, w3, b3 = params

    if use_pallas is None:
        use_pallas = B >= 1024
    if not use_pallas:
        # Tiny-batch / low-latency path: launch overhead of pallas_call would
        # dominate; let XLA fuse the MLP into the surrounding graph.
        h1 = jnp.maximum(x.astype(jnp.float32) @ w1 + b1, 0.0)
        h2 = jnp.maximum(h1 @ w2 + b2, 0.0)
        return (h2 @ w3 + b3).astype(out_dtype)

    # Balanced batch tiles: multiple of 8 (f32 sublane granularity), capped at
    # 4096 so per-step VMEM stays well inside v7x's smaller budget.  The grid
    # uses cdiv so a ragged last block is handled by Pallas' clamped DMAs
    # (per-row independence means the overhang rows never contaminate valid
    # rows, and they are never written back) -- no wrapper-side pad copy.
    n_tiles = max(1, _cdiv(B, block_b))
    TB = min(_round_up(_cdiv(B, n_tiles), 8), 4096)
    grid_b = _cdiv(B, TB)

    resident = lambda a: pl.BlockSpec(a.shape, lambda i: (0, 0))

    out = pl.pallas_call(
        _mapnet_kernel,
        out_shape=jax.ShapeDtypeStruct((B, 128), out_dtype),
        grid=(grid_b,),
        in_specs=[
            pl.BlockSpec((TB, F), lambda i: (i, 0)),     # streamed x tiles
            resident(w1), resident(b1),                  # weights stay in VMEM
            resident(w2), resident(b2),
            resident(w3), resident(b3),
        ],
        out_specs=pl.BlockSpec((TB, 128), lambda i: (i, 0)),
        compiler_params=pltpu.CompilerParams(
            dimension_semantics=("parallel",)),          # megacore split on v7x
    )(x, w1, b1, w2, b2, w3, b3)

    return out


def init_params(key):
    """Deterministic init mimicking PyTorch's default Linear init:
    U(-1/sqrt(fan_in), 1/sqrt(fan_in)).  Weights stored as (in, out), f32."""
    sizes = [(25, 64), (64, 128), (128, 128)]
    params = []
    for (fan_in, fan_out) in sizes:
        key, kw, kb = jax.random.split(key, 3)
        bound = 1.0 / (fan_in ** 0.5)
        w = jax.random.uniform(kw, (fan_in, fan_out), jnp.float32, -bound, bound)
        b = jax.random.uniform(kb, (1, fan_out), jnp.float32, -bound, bound)
        params += [w, b]
    return tuple(params)


def mapnet_reference(maps, params):
    """Pure-JAX f32 reference for a sanity check."""
    B = maps.shape[0]
    x = maps.reshape(B, -1).astype(jnp.float32)
    w1, b1, w2, b2, w3, b3 = params
    h1 = jnp.maximum(x @ w1 + b1, 0.0)
    h2 = jnp.maximum(h1 @ w2 + b2, 0.0)
    return h2 @ w3 + b3


if __name__ == "__main__":
    key = jax.random.PRNGKey(0)
    k_params, k_maps, k_maps2 = jax.random.split(key, 3)

    params = init_params(k_params)

    # Small demo shape from the module: B=8 maps of 5x5 -> 25 features.
    maps = jax.random.normal(k_maps, (8, 5, 5), jnp.float32)

    # Force the Pallas path so the kernel itself is exercised at the demo size.
    out = jax.block_until_ready(mapnet_forward(maps, params, use_pallas=True))
    ref = mapnet_reference(maps, params)
    assert out.shape == (8, 128), out.shape
    # f32 MXU operands; tolerance covers possible reduced-precision MXU passes.
    assert jnp.allclose(out, ref, atol=2e-2, rtol=2e-2), "pallas path mismatch"

    # Auto-dispatch path (small B -> fused XLA MLP), exact f32.
    out_auto = jax.block_until_ready(mapnet_forward(maps, params))
    assert jnp.allclose(out_auto, ref, atol=1e-5, rtol=1e-5), "xla path mismatch"

    # Multi-tile grid with a ragged last block (no wrapper-side padding copy):
    # B=200, block_b=64 -> 4 tiles of 56 rows, last tile only 32 rows valid.
    maps2 = jax.random.normal(k_maps2, (200, 5, 5), jnp.float32)
    out2 = jax.block_until_ready(
        mapnet_forward(maps2, params, block_b=64, use_pallas=True))
    ref2 = mapnet_reference(maps2, params)
    assert out2.shape == (200, 128), out2.shape
    assert jnp.allclose(out2, ref2, atol=2e-2, rtol=2e-2), "ragged-tile mismatch"

    print("KERNEL_OK")
</pallas_src>

<mosaic_0001>
module attributes {stable_mosaic.version = 11 : i64} {
  func.func @_mapnet_kernel(%arg0: i32, %arg1: memref<8x25xf32, #tpu.memory_space<vmem>>, %arg2: memref<25x64xf32, #tpu.memory_space<vmem>>, %arg3: memref<1x64xf32, #tpu.memory_space<vmem>>, %arg4: memref<64x128xf32, #tpu.memory_space<vmem>>, %arg5: memref<1x128xf32, #tpu.memory_space<vmem>>, %arg6: memref<128x128xf32, #tpu.memory_space<vmem>>, %arg7: memref<1x128xf32, #tpu.memory_space<vmem>>, %arg8: memref<8x128xf32, #tpu.memory_space<vmem>>) attributes {dimension_semantics = [#tpu.dimension_semantics<parallel>], iteration_bounds = array<i64: 1>, scalar_prefetch = 0 : i64, scratch_operands = 0 : i64, tpu.core_type = #tpu.core_type<tc>, window_params = [{transform_indices = @transform_0, window_bounds = array<i64: 8, 25>}, {pipeline_mode = #tpu.pipeline_mode<synchronous>, transform_indices = @transform_1, window_bounds = array<i64: 25, 64>}, {pipeline_mode = #tpu.pipeline_mode<synchronous>, transform_indices = @transform_2, window_bounds = array<i64: 1, 64>}, {pipeline_mode = #tpu.pipeline_mode<synchronous>, transform_indices = @transform_3, window_bounds = array<i64: 64, 128>}, {pipeline_mode = #tpu.pipeline_mode<synchronous>, transform_indices = @transform_4, window_bounds = array<i64: 1, 128>}, {pipeline_mode = #tpu.pipeline_mode<synchronous>, transform_indices = @transform_5, window_bounds = array<i64: 128, 128>}, {pipeline_mode = #tpu.pipeline_mode<synchronous>, transform_indices = @transform_6, window_bounds = array<i64: 1, 128>}, {transform_indices = @transform_7, window_bounds = array<i64: 8, 128>}]} {
    %c0 = arith.constant 0 : index
    %c0_0 = arith.constant 0 : index
    %0 = vector.load %arg1[%c0, %c0_0] : memref<8x25xf32, #tpu.memory_space<vmem>>, vector<8x25xf32>
    %c0_1 = arith.constant 0 : index
    %c0_2 = arith.constant 0 : index
    %1 = vector.load %arg2[%c0_1, %c0_2] : memref<25x64xf32, #tpu.memory_space<vmem>>, vector<25x64xf32>
    %cst = arith.constant dense<0.000000e+00> : vector<8x64xf32>
    %2 = tpu.matmul %0, %1, %cst {dimension_numbers = #tpu.dot_dimension_numbers<[1], [0], [0], [1], [0, 0, 1, 1], [], []>} : vector<8x25xf32>, vector<25x64xf32>, vector<8x64xf32> -> vector<8x64xf32>
    %c0_3 = arith.constant 0 : index
    %c0_4 = arith.constant 0 : index
    %3 = vector.load %arg3[%c0_3, %c0_4] : memref<1x64xf32, #tpu.memory_space<vmem>>, vector<1x64xf32>
    %4 = vector.broadcast %3 : vector<1x64xf32> to vector<8x64xf32>
    %5 = arith.addf %2, %4 : vector<8x64xf32>
    %cst_5 = arith.constant 0.000000e+00 : f32
    %6 = vector.broadcast %cst_5 : f32 to vector<8x64xf32>
    %7 = arith.maximumf %5, %6 : vector<8x64xf32>
    %c0_6 = arith.constant 0 : index
    %c0_7 = arith.constant 0 : index
    %8 = vector.load %arg4[%c0_6, %c0_7] : memref<64x128xf32, #tpu.memory_space<vmem>>, vector<64x128xf32>
    %cst_8 = arith.constant dense<0.000000e+00> : vector<8x128xf32>
    %9 = tpu.matmul %7, %8, %cst_8 {dimension_numbers = #tpu.dot_dimension_numbers<[1], [0], [0], [1], [0, 0, 1, 1], [], []>} : vector<8x64xf32>, vector<64x128xf32>, vector<8x128xf32> -> vector<8x128xf32>
    %c0_9 = arith.constant 0 : index
    %c0_10 = arith.constant 0 : index
    %10 = vector.load %arg5[%c0_9, %c0_10] : memref<1x128xf32, #tpu.memory_space<vmem>>, vector<1x128xf32>
    %11 = vector.broadcast %10 : vector<1x128xf32> to vector<8x128xf32>
    %12 = arith.addf %9, %11 : vector<8x128xf32>
    %cst_11 = arith.constant 0.000000e+00 : f32
    %13 = vector.broadcast %cst_11 : f32 to vector<8x128xf32>
    %14 = arith.maximumf %12, %13 : vector<8x128xf32>
    %c0_12 = arith.constant 0 : index
    %c0_13 = arith.constant 0 : index
    %15 = vector.load %arg6[%c0_12, %c0_13] : memref<128x128xf32, #tpu.memory_space<vmem>>, vector<128x128xf32>
    %cst_14 = arith.constant dense<0.000000e+00> : vector<8x128xf32>
    %16 = tpu.matmul %14, %15, %cst_14 {dimension_numbers = #tpu.dot_dimension_numbers<[1], [0], [0], [1], [0, 0, 1, 1], [], []>} : vector<8x128xf32>, vector<128x128xf32>, vector<8x128xf32> -> vector<8x128xf32>
    %c0_15 = arith.constant 0 : index
    %c0_16 = arith.constant 0 : index
    %17 = vector.load %arg7[%c0_15, %c0_16] : memref<1x128xf32, #tpu.memory_space<vmem>>, vector<1x128xf32>
    %18 = vector.broadcast %17 : vector<1x128xf32> to vector<8x128xf32>
    %19 = arith.addf %16, %18 : vector<8x128xf32>
    %c0_17 = arith.constant 0 : index
    %c0_18 = arith.constant 0 : index
    %20 = vector.load %arg8[%c0_17, %c0_18] : memref<8x128xf32, #tpu.memory_space<vmem>>, vector<8x128xf32>
    tpu.vector_store %arg8[%c0_17, %c0_18], %19 {strides = array<i32>} : memref<8x128xf32, #tpu.memory_space<vmem>>, vector<8x128xf32>,
    return
  }
  func.func @transform_0(%arg0: i32) -> (i32, i32) {
    %c0_i32 = arith.constant 0 : i32
    %c0_i32_0 = arith.constant 0 : i32
    return %arg0, %c0_i32 : i32, i32
  }
  func.func @transform_1(%arg0: i32) -> (i32, i32) {
    %c0_i32 = arith.constant 0 : i32
    %c0_i32_0 = arith.constant 0 : i32
    %c0_i32_1 = arith.constant 0 : i32
    return %c0_i32, %c0_i32_0 : i32, i32
  }
  func.func @transform_2(%arg0: i32) -> (i32, i32) {
    %c0_i32 = arith.constant 0 : i32
    %c0_i32_0 = arith.constant 0 : i32
    %c0_i32_1 = arith.constant 0 : i32
    return %c0_i32, %c0_i32_0 : i32, i32
  }
  func.func @transform_3(%arg0: i32) -> (i32, i32) {
    %c0_i32 = arith.constant 0 : i32
    %c0_i32_0 = arith.constant 0 : i32
    %c0_i32_1 = arith.constant 0 : i32
    return %c0_i32, %c0_i32_0 : i32, i32
  }
  func.func @transform_4(%arg0: i32) -> (i32, i32) {
    %c0_i32 = arith.constant 0 : i32
    %c0_i32_0 = arith.constant 0 : i32
    %c0_i32_1 = arith.constant 0 : i32
    return %c0_i32, %c0_i32_0 : i32, i32
  }
  func.func @transform_5(%arg0: i32) -> (i32, i32) {
    %c0_i32 = arith.constant 0 : i32
    %c0_i32_0 = arith.constant 0 : i32
    %c0_i32_1 = arith.constant 0 : i32
    return %c0_i32, %c0_i32_0 : i32, i32
  }
  func.func @transform_6(%arg0: i32) -> (i32, i32) {
    %c0_i32 = arith.constant 0 : i32
    %c0_i32_0 = arith.constant 0 : i32
    %c0_i32_1 = arith.constant 0 : i32
    return %c0_i32, %c0_i32_0 : i32, i32
  }
  func.func @transform_7(%arg0: i32) -> (i32, i32) {
    %c0_i32 = arith.constant 0 : i32
    %c0_i32_0 = arith.constant 0 : i32
    return %arg0, %c0_i32 : i32, i32
  }
}

</mosaic_0001>

<llo_original>
// kernel: mapnet_forward.1
$region0: #{mapnet_forward.1}
  #allocation0 [shape = 'u32[]', space=smem, size = 0x4, offset = 0x4, fixed_abs, tag = 'smem constant byte address 0x4 - core index']
  #allocation1 [shape = 'u32[72,128]{1,0:T(1,128)}', space=vmem, size = 0x9000, scoped, tag = 'internal scratch']
  %s0 = inlined_call_operand.vmem [shape: f32[8,25], index: 0, kind: input, shape index: {}]
  %s1 = inlined_call_operand.vmem [shape: f32[25,64], index: 1, kind: input, shape index: {}]
  %s2 = inlined_call_operand.vmem [shape: f32[1,64], index: 2, kind: input, shape index: {}]
  %s3 = inlined_call_operand.hbm [shape: f32[64,128], index: 3, kind: input, shape index: {}]
  %s4 = inlined_call_operand.vmem [shape: f32[1,128], index: 4, kind: input, shape index: {}]
  %s5 = inlined_call_operand.vmem [shape: f32[128,128], index: 5, kind: input, shape index: {}]
  %s6 = inlined_call_operand.vmem [shape: f32[1,128], index: 6, kind: input, shape index: {}]
  %s7 = inlined_call_operand.hbm [shape: f32[8,128], index: 7, kind: output, shape index: {}]
  %s8 = sld [smem:[#allocation0]]
  $region42: #{mapnet_forward.1} parent=0
    _
  %s10 = ssub.s32 1, %s8
  %s11 = scalar_select 0, %s10, %s8
  $region1: #{mapnet_forward.1} parent=0
    #allocation2 [shape = 'u8[32768]{0}', space=vmem, size = 0x8000, scoped, tag = 'input window, operand 3, single buffered']
    #allocation3 [shape = 's32[1]{0}', space=sflag, size = 0x4, scoped, tag = 'scoped memory for mapnet_forward.1']
    #allocation4 [shape = 's32[1]{0}', space=sflag, size = 0x4, scoped, tag = 'scoped memory for mapnet_forward.1']
    #allocation5 [shape = 'u8[4096]{0}', space=vmem, size = 0x1000, scoped, tag = 'output window, operand 0, single buffered']
    %12 = vsyncpa [#allocation3], 0
    %13 = vsyncpa [#allocation4], 0
    // Predicated region
    $region2: #{mapnet_forward.1} parent=1 // pred_check
      _
    $region3: #{mapnet_forward.1} parent=1 // pred_check_branch
      %15 = sbr.rel (0) target = $region5
    $region4: #{mapnet_forward.1} parent=1 // pred_region
      _
    $region5: #{mapnet_forward.1} parent=1 // pred_fallthru
      _
    // Predicated region
    $region6: #{mapnet_forward.1} parent=1 // pred_check
      _
    $region7: #{mapnet_forward.1} parent=1 // pred_check_branch
      %17 = sbr.rel (0) target = $region9
    $region8: #{mapnet_forward.1} parent=1 // pred_region
      _
    $region9: #{mapnet_forward.1} parent=1 // pred_fallthru
      _
    // Predicated region
    $region10: #{mapnet_forward.1} parent=1 // pred_check
      _
    $region11: #{mapnet_forward.1} parent=1 // pred_check_branch
      %19 = sbr.rel (0) target = $region13
    $region12: #{mapnet_forward.1} parent=1 // pred_region
      _
    $region13: #{mapnet_forward.1} parent=1 // pred_fallthru
      _
    // Predicated region
    $region14: #{mapnet_forward.1} parent=1 // pred_check
      _
    $region15: #{mapnet_forward.1} parent=1 // pred_check_branch
      %21 = sbr.rel (0) target = $region17
    $region16: #{mapnet_forward.1} parent=1 // pred_region
      %23 = vsyncadd [#allocation3], 0
      %s24 = sshll.u32 %s3, 4
      %s25 = int_to_ptr.hbm [resolvable:$true] %s24
      %s26 = sshll.u32 [#allocation2], 4
      %s27 = int_to_ptr.vmem [resolvable:$true] %s26
      %32 = dma.hbm_to_vmem [thread:$0]  %s25, 1024, %s27, [#allocation3], 128, 128, 8
    $region17: #{mapnet_forward.1} parent=1 // pred_fallthru
      _
    // Predicated region
    $region18: #{mapnet_forward.1} parent=1 // pred_check
      _
    $region19: #{mapnet_forward.1} parent=1 // pred_check_branch
      %34 = sbr.rel (0) target = $region21
    $region20: #{mapnet_forward.1} parent=1 // pred_region
      _
    $region21: #{mapnet_forward.1} parent=1 // pred_fallthru
      _
    // Predicated region
    $region22: #{mapnet_forward.1} parent=1 // pred_check
      _
    $region23: #{mapnet_forward.1} parent=1 // pred_check_branch
      %36 = sbr.rel (0) target = $region25
    $region24: #{mapnet_forward.1} parent=1 // pred_region
      _
    $region25: #{mapnet_forward.1} parent=1 // pred_fallthru
      _
    // Predicated region
    $region26: #{mapnet_forward.1} parent=1 // pred_check
      _
    $region27: #{mapnet_forward.1} parent=1 // pred_check_branch
      %38 = sbr.rel (0) target = $region29
    $region28: #{mapnet_forward.1} parent=1 // pred_region
      _
    $region29: #{mapnet_forward.1} parent=1 // pred_fallthru
      _
    // Predicated region
    $region30: #{mapnet_forward.1} parent=1 // pred_check
      _
    $region31: #{mapnet_forward.1} parent=1 // pred_check_branch
      %40 = sbr.rel (0) target = $region33
    $region32: #{mapnet_forward.1} parent=1 // pred_region
      %42 = dma.done [#allocation3], 1024
    $region33: #{mapnet_forward.1} parent=1 // pred_fallthru
      _
    %v43 = vld [vmem:[%s0] sm:$0xff]
    %v44 = vld [vmem:[%s1] sm:$0xff]
    %v45 = vld [vmem:[%s1 + $0x8] sm:$0xff]
    %v46 = vld [vmem:[%s1 + $0x10] sm:$0xff]
    %v47 = vld [vmem:[%s1 + $0x18] sm:$0x1]
    %v48 = vld [vmem:[%s2] sm:$0x1]
    %v50 = vperm.slane %v48, 0
    %vm52 = vcmask 203776
    %v54 = vsel %vm52, %v43, 0
    %vm56 = vcmask 1040384
    %v58 = vsel %vm56, %v47, 0
    %60 = vmatpush.msra.mxu0 0.0
    %61 = vmatpush.msra.mxu0 0.0
    %62 = vmatpush.msra.mxu0 0.0
    %63 = vmatpush.msra.mxu0 0.0
    %64 = vmatpush.msra.mxu0 0.0
    %65 = vmatpush.msra.mxu0 0.0
    %66 = vmatpush.msra.mxu0 0.0
    %67 = vmatpush.msra.mxu0 0.0
    %68 = vmatpush.msra.mxu0 0.0
    %69 = vmatpush.msra.mxu0 0.0
    %70 = vmatpush.msra.mxu0 0.0
    %71 = vmatpush.msra.mxu0 0.0
    %72 = vmatpush.msra.mxu0 %v58
    %73 = vmatpush.msra.mxu0 %v46
    %74 = vmatpush.msra.mxu0 %v45
    %75 = vmatpush.msra.mxu0 %v44
    %76 = vmatmul.f32.gmra.mxu0 %v54
    %v77 = vpop.f32.mrf.mxu0
    %v78 = vadd.f32 %v50, %v77
    %79 = vdwg.mxu0
    %v80 = vmax.f32 %v78, 0.0
    %v81 = vld [vmem:[#allocation2] sm:$0xff]
    %v82 = vld [vmem:[#allocation2 + $0x8] sm:$0xff]
    %v83 = vld [vmem:[#allocation2 + $0x10] sm:$0xff]
    %v84 = vld [vmem:[#allocation2 + $0x18] sm:$0xff]
    %v85 = vld [vmem:[#allocation2 + $0x20] sm:$0xff]
    %v86 = vld [vmem:[#allocation2 + $0x28] sm:$0xff]
    %v87 = vld [vmem:[#allocation2 + $0x30] sm:$0xff]
    %v88 = vld [vmem:[#allocation2 + $0x38] sm:$0xff]
    %v89 = vld [vmem:[%s4] sm:$0x1]
    %v91 = vperm.slane %v89, 0
    %vm93 = vcmask 523264
    %v95 = vsel %vm93, %v80, 0
    %97 = vmatpush.msra.mxu0 0.0
    %98 = vmatpush.msra.mxu0 0.0
    %99 = vmatpush.msra.mxu0 0.0
    %100 = vmatpush.msra.mxu0 0.0
    %101 = vmatpush.msra.mxu0 0.0
    %102 = vmatpush.msra.mxu0 0.0
    %103 = vmatpush.msra.mxu0 0.0
    %104 = vmatpush.msra.mxu0 0.0
    %105 = vmatpush.msra.mxu0 %v88
    %106 = vmatpush.msra.mxu0 %v87
    %107 = vmatpush.msra.mxu0 %v86
    %108 = vmatpush.msra.mxu0 %v85
    %109 = vmatpush.msra.mxu0 %v84
    %110 = vmatpush.msra.mxu0 %v83
    %111 = vmatpush.msra.mxu0 %v82
    %112 = vmatpush.msra.mxu0 %v81
    %113 = vmatmul.f32.gmra.mxu0 %v95
    %v114 = vpop.f32.mrf.mxu0
    %v115 = vadd.f32 %v91, %v114
    %116 = vdwg.mxu0
    %v117 = vmax.f32 %v115, 0.0
    %v118 = vld [vmem:[%s5] sm:$0xff]
    %v119 = vld [vmem:[%s5 + $0x8] sm:$0xff]
    %v120 = vld [vmem:[%s5 + $0x10] sm:$0xff]
    %v121 = vld [vmem:[%s5 + $0x18] sm:$0xff]
    %v122 = vld [vmem:[%s5 + $0x20] sm:$0xff]
    %v123 = vld [vmem:[%s5 + $0x28] sm:$0xff]
    %v124 = vld [vmem:[%s5 + $0x30] sm:$0xff]
    %v125 = vld [vmem:[%s5 + $0x38] sm:$0xff]
    %v126 = vld [vmem:[%s5 + $0x40] sm:$0xff]
    %v127 = vld [vmem:[%s5 + $0x48] sm:$0xff]
    %v128 = vld [vmem:[%s5 + $0x50] sm:$0xff]
    %v129 = vld [vmem:[%s5 + $0x58] sm:$0xff]
    %v130 = vld [vmem:[%s5 + $0x60] sm:$0xff]
    %v131 = vld [vmem:[%s5 + $0x68] sm:$0xff]
    %v132 = vld [vmem:[%s5 + $0x70] sm:$0xff]
    %v133 = vld [vmem:[%s5 + $0x78] sm:$0xff]
    %v134 = vld [vmem:[%s6] sm:$0x1]
    %v136 = vperm.slane %v134, 0
    %138 = vmatpush.msra.mxu0 %v133
    %139 = vmatpush.msra.mxu0 %v132
    %140 = vmatpush.msra.mxu0 %v131
    %141 = vmatpush.msra.mxu0 %v130
    %142 = vmatpush.msra.mxu0 %v129
    %143 = vmatpush.msra.mxu0 %v128
    %144 = vmatpush.msra.mxu0 %v127
    %145 = vmatpush.msra.mxu0 %v126
    %146 = vmatpush.msra.mxu0 %v125
    %147 = vmatpush.msra.mxu0 %v124
    %148 = vmatpush.msra.mxu0 %v123
    %149 = vmatpush.msra.mxu0 %v122
    %150 = vmatpush.msra.mxu0 %v121
    %151 = vmatpush.msra.mxu0 %v120
    %152 = vmatpush.msra.mxu0 %v119
    %153 = vmatpush.msra.mxu0 %v118
    %154 = vmatmul.f32.gmra.mxu0 %v117
    %v155 = vpop.f32.mrf.mxu0
    %v156 = vadd.f32 %v136, %v155
    %157 = vdwg.mxu0
    %158 = vst [vmem:[#allocation5] sm:$0xff] %v156
    // Predicated region
    $region34: #{mapnet_forward.1} parent=1 // pred_check
      _
    $region35: #{mapnet_forward.1} parent=1 // pred_check_branch
      %160 = sbr.rel (0) target = $region37
    $region36: #{mapnet_forward.1} parent=1 // pred_region
      %162 = vsyncadd [#allocation4], 0
      %s164 = sshll.u32 [#allocation5], 4
      %s165 = int_to_ptr.vmem [resolvable:$true] %s164
      %s166 = sshll.u32 %s7, 4
      %s167 = int_to_ptr.hbm [resolvable:$true] %s166
      %169 = dma.vmem_to_hbm [thread:$0]  %s165, 128, %s167, [#allocation4]
    $region37: #{mapnet_forward.1} parent=1 // pred_fallthru
      _
    // Predicated region
    $region38: #{mapnet_forward.1} parent=1 // pred_check
      _
    $region39: #{mapnet_forward.1} parent=1 // pred_check_branch
      %171 = sbr.rel (0) target = $region41
    $region40: #{mapnet_forward.1} parent=1 // pred_region
      %173 = dma.done [#allocation4], 128
    $region41: #{mapnet_forward.1} parent=1 // pred_fallthru
      _
    %174 = vsyncpa [#allocation3], 1
    %175 = vsyncpa [#allocation4], 1

</llo_original>
